<compile_context>
chip_gen: v5e
topology: v5e:2x2
jax: 0.10.0
libtpu: 0.0.40
codegen_flags: <defaults>
</compile_context>

<pallas_src>
import functools

import jax
import jax.numpy as jnp
from jax.experimental import pallas as pl
from jax.experimental.pallas import tpu as pltpu


def _round_up(x, m):
    return ((x + m - 1) // m) * m


def _pick_tile(padded_dim, target):
    """Largest multiple of 128 that is <= target and divides padded_dim."""
    t = min(max(target, 128), padded_dim)
    t = (t // 128) * 128
    while padded_dim % t != 0:
        t -= 128
    return max(t, 128)


def _pad2d(x, rows, cols, dtype):
    """Zero-pad (and cast) a 2-D array; no-op if already the right shape & dtype."""
    x = jnp.asarray(x)
    if x.shape == (rows, cols) and x.dtype == jnp.dtype(dtype):
        return x
    out = jnp.zeros((rows, cols), dtype)
    return out.at[: x.shape[0], : x.shape[1]].set(x.astype(dtype))


# --------------------------------------------------------------------------------------
# Kernel 1: NodeApplyModule / BayesianLinear (bias=False):  HW = H @ W   (emitted bf16)
# --------------------------------------------------------------------------------------
def _node_linear_kernel(h_ref, w_ref, hw_ref):
    hw_ref[...] = jnp.dot(
        h_ref[...], w_ref[...], preferred_element_type=jnp.float32
    ).astype(hw_ref.dtype)


# --------------------------------------------------------------------------------------
# Kernel 2: tiled message passing A @ HW (bf16 MXU, f32 accum into the output block)
#           + fused in-degree row-sum + scale + LayerNorm + ReLU epilogue.
# --------------------------------------------------------------------------------------
def _gcn_aggregate_kernel(adj_ref, hw_ref, snorm_ref, gamma_ref, beta_ref,
                          o_ref, deg_ref, *, dout, eps, mean_agg, hw_resident, tk):
    k = pl.program_id(1)

    @pl.when(k == 0)
    def _():
        o_ref[...] = jnp.zeros_like(o_ref)
        deg_ref[...] = jnp.zeros_like(deg_ref)

    adj = adj_ref[...]                                   # bf16 (0/1 edges are exact)
    if hw_resident:
        start = pl.multiple_of(k * tk, 128)
        hw = hw_ref[pl.ds(start, tk), :]                 # slice resident HW in VMEM
    else:
        hw = hw_ref[...]                                 # streamed HW tile (bf16)

    # bf16 x bf16 MXU matmul with f32 accumulation directly into the resident
    # output block (its index_map ignores k).
    o_ref[...] += jnp.dot(adj, hw, preferred_element_type=jnp.float32)

    if mean_agg:
        # In-degree row sums fused into the streaming pass; lands on VALU/XLU slots
        # that have slack while the MXU runs.
        deg_ref[...] += jnp.sum(adj.astype(jnp.float32), axis=-1, keepdims=True)

    @pl.when(k == pl.num_programs(1) - 1)
    def _():
        # Fused per-row scale: deg_inv (mean reduce) * snorm_n (graph_norm).
        if mean_agg:
            scale = snorm_ref[...] / jnp.maximum(deg_ref[...], 1.0)
        else:
            scale = snorm_ref[...]
        z = o_ref[...] * scale

        # LayerNorm over the real feature width (padded lanes hold exact zeros).
        mask = (jax.lax.broadcasted_iota(jnp.int32, z.shape, 1) < dout
                ).astype(jnp.float32)
        inv_d = 1.0 / float(dout)
        mean = jnp.sum(z, axis=-1, keepdims=True) * inv_d
        centered = (z - mean) * mask
        var = jnp.sum(centered * centered, axis=-1, keepdims=True) * inv_d
        zn = centered * jax.lax.rsqrt(var + eps)
        zn = zn * gamma_ref[...] + beta_ref[...]

        # activation: ReLU;  dropout: identity in eval mode.
        o_ref[...] = jnp.maximum(zn, 0.0).astype(o_ref.dtype)


# --------------------------------------------------------------------------------------
# Wrapper
# --------------------------------------------------------------------------------------
def gcn_layer_forward(adj, h, w, snorm_n, gamma, beta, *, agg="mean",
                      eps=1e-5, tm=512, tk=1024, hw_resident=None):
    """adj:[N,N] dense 0/1 (f32 or pre-cast bf16), h:[N,Din], w:[Din,Dout] (sampled
    Bayesian weight), snorm_n:[N,1], gamma/beta:[Dout]. Returns [N,Dout] float32."""
    N, Din = h.shape
    Dout = w.shape[1]

    # Pad every dim to a 128-multiple (zero padding is exact); skip copies when the
    # caller already provides aligned / bf16 data.
    n_pad = _round_up(N, 128)
    din_pad = _round_up(Din, 128)
    dout_pad = _round_up(Dout, 128)

    adj_p = _pad2d(adj, n_pad, n_pad, jnp.bfloat16)          # 0/1 -> bf16 exact
    h_p = _pad2d(h, n_pad, din_pad, jnp.float32)
    w_p = _pad2d(w, din_pad, dout_pad, jnp.float32)
    snorm_p = _pad2d(jnp.asarray(snorm_n, jnp.float32).reshape(N, 1),
                     n_pad, 1, jnp.float32)
    gamma_p = _pad2d(jnp.asarray(gamma, jnp.float32).reshape(1, Dout),
                     1, dout_pad, jnp.float32)
    beta_p = _pad2d(jnp.asarray(beta, jnp.float32).reshape(1, Dout),
                    1, dout_pad, jnp.float32)

    # Tile selection.
    tm_ = _pick_tile(n_pad, tm)          # row tile (parallel axis)
    # v7x megacore: guarantee >= 2 row tiles so both TensorCores get work.
    if n_pad // tm_ < 2 and n_pad >= 256:
        tm_ = _pick_tile(n_pad, max((n_pad // 2) // 128 * 128, 128))
    tk_ = _pick_tile(n_pad, tk)          # adjacency-column / reduction tile

    # Keep HW fully VMEM-resident (bf16) for moderate graphs; stream otherwise.
    if hw_resident is None:
        hw_resident = (2 * n_pad * dout_pad * 2) <= (16 << 20)

    # ---- stage 1: HW = H @ W  (small f32 matmul, emitted as bf16) ----
    tm1 = _pick_tile(n_pad, 512)
    hw = pl.pallas_call(
        _node_linear_kernel,
        out_shape=jax.ShapeDtypeStruct((n_pad, dout_pad), jnp.bfloat16),
        grid=(n_pad // tm1,),
        in_specs=[
            pl.BlockSpec((tm1, din_pad), lambda i: (i, 0)),
            pl.BlockSpec((din_pad, dout_pad), lambda i: (0, 0)),
        ],
        out_specs=pl.BlockSpec((tm1, dout_pad), lambda i: (i, 0)),
        compiler_params=pltpu.CompilerParams(
            dimension_semantics=("parallel",)),
    )(h_p, w_p)

    # ---- stage 2: tiled A @ HW with fused degree / scale / LayerNorm / ReLU ----
    if hw_resident:
        hw_spec = pl.BlockSpec((n_pad, dout_pad), lambda i, k: (0, 0))
        hw_buf_bytes = 2 * n_pad * dout_pad * 2
    else:
        hw_spec = pl.BlockSpec((tk_, dout_pad), lambda i, k: (k, 0))
        hw_buf_bytes = 2 * tk_ * dout_pad * 2

    # Explicit scoped-VMEM budget, kept under v7x's 64 MiB physical VMEM.
    est = (2 * tm_ * tk_ * 2            # adjacency tiles (bf16, double-buffered)
           + hw_buf_bytes               # H@W buffers (bf16)
           + 2 * tm_ * dout_pad * 4     # resident f32 output block
           + tm_ * tk_ * 4              # f32 temp for the in-kernel degree row-sum
           + 3 * tm_ * 128 * 4          # deg scratch + snorm blocks (lane padded)
           + 4 * dout_pad * 4)          # gamma / beta
    vmem_limit = int(min(max(2 * est, 32 << 20), 48 << 20))

    kernel = functools.partial(
        _gcn_aggregate_kernel,
        dout=Dout, eps=eps, mean_agg=(agg == "mean"),
        hw_resident=hw_resident, tk=tk_)

    out_p = pl.pallas_call(
        kernel,
        out_shape=jax.ShapeDtypeStruct((n_pad, dout_pad), jnp.float32),
        grid=(n_pad // tm_, n_pad // tk_),
        in_specs=[
            pl.BlockSpec((tm_, tk_), lambda i, k: (i, k)),     # adjacency (bf16)
            hw_spec,                                           # H@W (bf16)
            pl.BlockSpec((tm_, 1), lambda i, k: (i, 0)),       # snorm_n rows
            pl.BlockSpec((1, dout_pad), lambda i, k: (0, 0)),  # LayerNorm gamma
            pl.BlockSpec((1, dout_pad), lambda i, k: (0, 0)),  # LayerNorm beta
        ],
        out_specs=pl.BlockSpec((tm_, dout_pad), lambda i, k: (i, 0)),
        scratch_shapes=[pltpu.VMEM((tm_, 1), jnp.float32)],    # in-degree accumulator
        compiler_params=pltpu.CompilerParams(
            dimension_semantics=("parallel", "arbitrary"),
            vmem_limit_bytes=vmem_limit),
    )(adj_p, hw, snorm_p, gamma_p, beta_p)

    return out_p[:N, :Dout]


# --------------------------------------------------------------------------------------
# Pure-JAX reference (mirrors the PyTorch module forward, eval mode)
# --------------------------------------------------------------------------------------
def reference_forward(adj, h, w, snorm_n, gamma, beta, agg="mean", eps=1e-5):
    adj = adj.astype(jnp.float32)
    agg_h = jnp.dot(adj, h, precision=jax.lax.Precision.HIGHEST)
    if agg == "mean":
        deg = jnp.sum(adj, axis=1, keepdims=True)
        agg_h = agg_h / jnp.maximum(deg, 1.0)
    z = jnp.dot(agg_h, w, precision=jax.lax.Precision.HIGHEST)
    z = z * snorm_n
    mean = z.mean(axis=-1, keepdims=True)
    var = ((z - mean) ** 2).mean(axis=-1, keepdims=True)
    z = (z - mean) * jax.lax.rsqrt(var + eps)
    z = z * gamma.reshape(1, -1) + beta.reshape(1, -1)
    return jnp.maximum(z, 0.0)


def _run_case(key, N, in_dim, out_dim, agg, density, **fwd_kwargs):
    k_adj, k_h, k_mu, k_eps, k_g, k_b = jax.random.split(key, 6)

    adj = (jax.random.uniform(k_adj, (N, N)) < density).astype(jnp.float32)
    adj = jnp.maximum(adj, jnp.eye(N, dtype=jnp.float32))   # self-loops: in-degree >= 1

    h = jax.random.normal(k_h, (N, in_dim), dtype=jnp.float32)
    snorm_n = jnp.full((N, 1), 1.0 / jnp.sqrt(float(N)), dtype=jnp.float32)

    # BayesianLinear weight sampled deterministically: W = mu + softplus(rho) * eps.
    mu = jax.random.normal(k_mu, (in_dim, out_dim), dtype=jnp.float32) * 0.1
    rho = jnp.full((in_dim, out_dim), -3.0, dtype=jnp.float32)
    eps_w = jax.random.normal(k_eps, (in_dim, out_dim), dtype=jnp.float32)
    w = mu + jnp.log1p(jnp.exp(rho)) * eps_w

    gamma = 1.0 + 0.1 * jax.random.normal(k_g, (out_dim,), dtype=jnp.float32)
    beta = 0.05 * jax.random.normal(k_b, (out_dim,), dtype=jnp.float32)

    out = gcn_layer_forward(adj, h, w, snorm_n, gamma, beta, agg=agg, **fwd_kwargs)
    out = jax.block_until_ready(out)

    ref = reference_forward(adj, h, w, snorm_n, gamma, beta, agg=agg)
    assert out.shape == (N, out_dim)
    assert jnp.allclose(out, ref, atol=3e-2, rtol=3e-2), (
        f"mismatch vs JAX reference (N={N}, agg={agg}), "
        f"max abs diff = {float(jnp.max(jnp.abs(out - ref)))}")
    return out


if __name__ == "__main__":
    key = jax.random.PRNGKey(0)
    k1, k2 = jax.random.split(key, 2)

    # Case 1: small graph, mean aggregation, resident-HW path,
    #         >=2 row tiles (v7x megacore guard kicks in).
    _run_case(k1, N=200, in_dim=64, out_dim=32, agg="mean", density=0.3)

    # Case 2: multi row-tile / multi k-tile grid (exercises the k==0 reset and
    #         accumulate path), sum aggregation, streaming-HW fallback path.
    _run_case(k2, N=700, in_dim=96, out_dim=40, agg="sum", density=0.15,
              tm=256, tk=256, hw_resident=False)

    print("KERNEL_OK")
</pallas_src>

<mosaic_0001>
module attributes {stable_mosaic.version = 11 : i64} {
  func.func @_node_linear_kernel(%arg0: i32, %arg1: memref<256x128xf32, #tpu.memory_space<vmem>>, %arg2: memref<128x128xf32, #tpu.memory_space<vmem>>, %arg3: memref<256x128xbf16, #tpu.memory_space<vmem>>) attributes {dimension_semantics = [#tpu.dimension_semantics<parallel>], iteration_bounds = array<i64: 1>, scalar_prefetch = 0 : i64, scratch_operands = 0 : i64, tpu.core_type = #tpu.core_type<tc>, window_params = [{transform_indices = @transform_0, window_bounds = array<i64: 256, 128>}, {pipeline_mode = #tpu.pipeline_mode<synchronous>, transform_indices = @transform_1, window_bounds = array<i64: 128, 128>}, {transform_indices = @transform_2, window_bounds = array<i64: 256, 128>}]} {
    %c0 = arith.constant 0 : index
    %c0_0 = arith.constant 0 : index
    %0 = vector.load %arg1[%c0, %c0_0] : memref<256x128xf32, #tpu.memory_space<vmem>>, vector<256x128xf32>
    %c0_1 = arith.constant 0 : index
    %c0_2 = arith.constant 0 : index
    %1 = vector.load %arg2[%c0_1, %c0_2] : memref<128x128xf32, #tpu.memory_space<vmem>>, vector<128x128xf32>
    %cst = arith.constant dense<0.000000e+00> : vector<256x128xf32>
    %2 = tpu.matmul %0, %1, %cst {dimension_numbers = #tpu.dot_dimension_numbers<[1], [0], [0], [1], [0, 0, 1, 1], [], []>} : vector<256x128xf32>, vector<128x128xf32>, vector<256x128xf32> -> vector<256x128xf32>
    %3 = arith.truncf %2 : vector<256x128xf32> to vector<256x128xbf16>
    %c0_3 = arith.constant 0 : index
    %c0_4 = arith.constant 0 : index
    %4 = vector.load %arg3[%c0_3, %c0_4] : memref<256x128xbf16, #tpu.memory_space<vmem>>, vector<256x128xbf16>
    tpu.vector_store %arg3[%c0_3, %c0_4], %3 {strides = array<i32>} : memref<256x128xbf16, #tpu.memory_space<vmem>>, vector<256x128xbf16>,
    return
  }
  func.func @transform_0(%arg0: i32) -> (i32, i32) {
    %c0_i32 = arith.constant 0 : i32
    %c0_i32_0 = arith.constant 0 : i32
    return %arg0, %c0_i32 : i32, i32
  }
  func.func @transform_1(%arg0: i32) -> (i32, i32) {
    %c0_i32 = arith.constant 0 : i32
    %c0_i32_0 = arith.constant 0 : i32
    %c0_i32_1 = arith.constant 0 : i32
    return %c0_i32, %c0_i32_0 : i32, i32
  }
  func.func @transform_2(%arg0: i32) -> (i32, i32) {
    %c0_i32 = arith.constant 0 : i32
    %c0_i32_0 = arith.constant 0 : i32
    return %arg0, %c0_i32 : i32, i32
  }
}

</mosaic_0001>

<llo_original>
// kernel: tpu_custom_call.1
$region0: #{tpu_custom_call.1}
  #allocation0 [shape = 'u32[]', space=smem, size = 0x4, offset = 0x4, fixed_abs, tag = 'smem constant byte address 0x4 - core index']
  #allocation1 [shape = 'u32[72,128]{1,0:T(1,128)}', space=vmem, size = 0x9000, scoped, tag = 'internal scratch']
  %s0 = inlined_call_operand.hbm [shape: f32[256,128], index: 0, kind: input, shape index: {}]
  %s1 = inlined_call_operand.hbm [shape: f32[128,128], index: 1, kind: input, shape index: {}]
  %s2 = inlined_call_operand.hbm [shape: bf16[256,128], index: 2, kind: output, shape index: {}]
  %s3 = sld [smem:[#allocation0]]
  $region26: #{tpu_custom_call.1} parent=0
    _
  %s5 = ssub.s32 1, %s3
  %s6 = scalar_select 0, %s5, %s3
  $region1: #{tpu_custom_call.1} parent=0
    #allocation2 [shape = 'u8[131072]{0}', space=vmem, size = 0x20000, scoped, tag = 'input window, operand 0, single buffered']
    #allocation3 [shape = 's32[1]{0}', space=sflag, size = 0x4, scoped, tag = 'scoped memory for tpu_custom_call.1']
    #allocation4 [shape = 's32[1]{0}', space=sflag, size = 0x4, scoped, tag = 'scoped memory for tpu_custom_call.1']
    #allocation5 [shape = 'u8[65536]{0}', space=vmem, size = 0x10000, scoped, tag = 'input window, operand 1, single buffered']
    #allocation6 [shape = 's32[1]{0}', space=sflag, size = 0x4, scoped, tag = 'scoped memory for tpu_custom_call.1']
    #allocation7 [shape = 'u8[65536]{0}', space=vmem, size = 0x10000, scoped, tag = 'output window, operand 0, single buffered']
    %7 = vsyncpa [#allocation3], 0
    %8 = vsyncpa [#allocation6], 0
    %9 = vsyncpa [#allocation4], 0
    // Predicated region
    $region2: #{tpu_custom_call.1} parent=1 // pred_check
      _
    $region3: #{tpu_custom_call.1} parent=1 // pred_check_branch
      %11 = sbr.rel (0) target = $region5
    $region4: #{tpu_custom_call.1} parent=1 // pred_region
      %13 = vsyncadd [#allocation3], 0
      %s14 = sshll.u32 %s0, 4
      %s15 = int_to_ptr.hbm [resolvable:$true] %s14
      %s16 = sshll.u32 [#allocation2], 4
      %s17 = int_to_ptr.vmem [resolvable:$true] %s16
      %22 = dma.hbm_to_vmem [thread:$0]  %s15, 4096, %s17, [#allocation3], 128, 128, 8
    $region5: #{tpu_custom_call.1} parent=1 // pred_fallthru
      _
    // Predicated region
    $region6: #{tpu_custom_call.1} parent=1 // pred_check
      _
    $region7: #{tpu_custom_call.1} parent=1 // pred_check_branch
      %24 = sbr.rel (0) target = $region9
    $region8: #{tpu_custom_call.1} parent=1 // pred_region
      %26 = vsyncadd [#allocation6], 0
      %s27 = sshll.u32 %s1, 4
      %s28 = int_to_ptr.hbm [resolvable:$true] %s27
      %s29 = sshll.u32 [#allocation5], 4
      %s30 = int_to_ptr.vmem [resolvable:$true] %s29
      %35 = dma.hbm_to_vmem [thread:$0]  %s28, 2048, %s30, [#allocation6], 128, 128, 8
    $region9: #{tpu_custom_call.1} parent=1 // pred_fallthru
      _
    // Predicated region
    $region10: #{tpu_custom_call.1} parent=1 // pred_check
      _
    $region11: #{tpu_custom_call.1} parent=1 // pred_check_branch
      %37 = sbr.rel (0) target = $region13
    $region12: #{tpu_custom_call.1} parent=1 // pred_region
      %39 = dma.done [#allocation3], 4096
    $region13: #{tpu_custom_call.1} parent=1 // pred_fallthru
      _
    // Predicated region
    $region14: #{tpu_custom_call.1} parent=1 // pred_check
      _
    $region15: #{tpu_custom_call.1} parent=1 // pred_check_branch
      %41 = sbr.rel (0) target = $region17
    $region16: #{tpu_custom_call.1} parent=1 // pred_region
      %43 = dma.done [#allocation6], 2048
    $region17: #{tpu_custom_call.1} parent=1 // pred_fallthru
      _
    %v44 = vld [vmem:[#allocation2] sm:$0xff]
    %v45 = vld [vmem:[#allocation2 + $0x8] sm:$0xff]
    %v46 = vld [vmem:[#allocation2 + $0x10] sm:$0xff]
    %v47 = vld [vmem:[#allocation2 + $0x18] sm:$0xff]
    %v48 = vld [vmem:[#allocation2 + $0x20] sm:$0xff]
    %v49 = vld [vmem:[#allocation2 + $0x28] sm:$0xff]
    %v50 = vld [vmem:[#allocation2 + $0x30] sm:$0xff]
    %v51 = vld [vmem:[#allocation2 + $0x38] sm:$0xff]
    %v52 = vld [vmem:[#allocation2 + $0x40] sm:$0xff]
    %v53 = vld [vmem:[#allocation2 + $0x48] sm:$0xff]
    %v54 = vld [vmem:[#allocation2 + $0x50] sm:$0xff]
    %v55 = vld [vmem:[#allocation2 + $0x58] sm:$0xff]
    %v56 = vld [vmem:[#allocation2 + $0x60] sm:$0xff]
    %v57 = vld [vmem:[#allocation2 + $0x68] sm:$0xff]
    %v58 = vld [vmem:[#allocation2 + $0x70] sm:$0xff]
    %v59 = vld [vmem:[#allocation2 + $0x78] sm:$0xff]
    %v60 = vld [vmem:[#allocation2 + $0x80] sm:$0xff]
    %v61 = vld [vmem:[#allocation2 + $0x88] sm:$0xff]
    %v62 = vld [vmem:[#allocation2 + $0x90] sm:$0xff]
    %v63 = vld [vmem:[#allocation2 + $0x98] sm:$0xff]
    %v64 = vld [vmem:[#allocation2 + $0xa0] sm:$0xff]
    %v65 = vld [vmem:[#allocation2 + $0xa8] sm:$0xff]
    %v66 = vld [vmem:[#allocation2 + $0xb0] sm:$0xff]
    %v67 = vld [vmem:[#allocation2 + $0xb8] sm:$0xff]
    %v68 = vld [vmem:[#allocation2 + $0xc0] sm:$0xff]
    %v69 = vld [vmem:[#allocation2 + $0xc8] sm:$0xff]
    %v70 = vld [vmem:[#allocation2 + $0xd0] sm:$0xff]
    %v71 = vld [vmem:[#allocation2 + $0xd8] sm:$0xff]
    %v72 = vld [vmem:[#allocation2 + $0xe0] sm:$0xff]
    %v73 = vld [vmem:[#allocation2 + $0xe8] sm:$0xff]
    %v74 = vld [vmem:[#allocation2 + $0xf0] sm:$0xff]
    %v75 = vld [vmem:[#allocation2 + $0xf8] sm:$0xff]
    %v76 = vld [vmem:[#allocation5] sm:$0xff]
    %v77 = vld [vmem:[#allocation5 + $0x8] sm:$0xff]
    %v78 = vld [vmem:[#allocation5 + $0x10] sm:$0xff]
    %v79 = vld [vmem:[#allocation5 + $0x18] sm:$0xff]
    %v80 = vld [vmem:[#allocation5 + $0x20] sm:$0xff]
    %v81 = vld [vmem:[#allocation5 + $0x28] sm:$0xff]
    %v82 = vld [vmem:[#allocation5 + $0x30] sm:$0xff]
    %v83 = vld [vmem:[#allocation5 + $0x38] sm:$0xff]
    %v84 = vld [vmem:[#allocation5 + $0x40] sm:$0xff]
    %v85 = vld [vmem:[#allocation5 + $0x48] sm:$0xff]
    %v86 = vld [vmem:[#allocation5 + $0x50] sm:$0xff]
    %v87 = vld [vmem:[#allocation5 + $0x58] sm:$0xff]
    %v88 = vld [vmem:[#allocation5 + $0x60] sm:$0xff]
    %v89 = vld [vmem:[#allocation5 + $0x68] sm:$0xff]
    %v90 = vld [vmem:[#allocation5 + $0x70] sm:$0xff]
    %v91 = vld [vmem:[#allocation5 + $0x78] sm:$0xff]
    %92 = vmatpush.msra.mxu0 %v91
    %93 = vmatpush.msra.mxu0 %v90
    %94 = vmatpush.msra.mxu0 %v89
    %95 = vmatpush.msra.mxu0 %v88
    %96 = vmatpush.msra.mxu0 %v87
    %97 = vmatpush.msra.mxu0 %v86
    %98 = vmatpush.msra.mxu0 %v85
    %99 = vmatpush.msra.mxu0 %v84
    %100 = vmatpush.msra.mxu0 %v83
    %101 = vmatpush.msra.mxu0 %v82
    %102 = vmatpush.msra.mxu0 %v81
    %103 = vmatpush.msra.mxu0 %v80
    %104 = vmatpush.msra.mxu0 %v79
    %105 = vmatpush.msra.mxu0 %v78
    %106 = vmatpush.msra.mxu0 %v77
    %107 = vmatpush.msra.mxu0 %v76
    %108 = vmatmul.f32.gmra.mxu0 %v44
    %v109 = vpop.f32.mrf.mxu0
    %v110 = vadd.f32 0.0, %v109
    %111 = vmatmul.f32.gmra.mxu0 %v45
    %v112 = vpop.f32.mrf.mxu0
    %v113 = vadd.f32 0.0, %v112
    %114 = vmatmul.f32.gmra.mxu0 %v46
    %v115 = vpop.f32.mrf.mxu0
    %v116 = vadd.f32 0.0, %v115
    %117 = vmatmul.f32.gmra.mxu0 %v47
    %v118 = vpop.f32.mrf.mxu0
    %v119 = vadd.f32 0.0, %v118
    %120 = vmatmul.f32.gmra.mxu0 %v48
    %v121 = vpop.f32.mrf.mxu0
    %v122 = vadd.f32 0.0, %v121
    %123 = vmatmul.f32.gmra.mxu0 %v49
    %v124 = vpop.f32.mrf.mxu0
    %v125 = vadd.f32 0.0, %v124
    %126 = vmatmul.f32.gmra.mxu0 %v50
    %v127 = vpop.f32.mrf.mxu0
    %v128 = vadd.f32 0.0, %v127
    %129 = vmatmul.f32.gmra.mxu0 %v51
    %v130 = vpop.f32.mrf.mxu0
    %v131 = vadd.f32 0.0, %v130
    %132 = vmatmul.f32.gmra.mxu0 %v52
    %v133 = vpop.f32.mrf.mxu0
    %v134 = vadd.f32 0.0, %v133
    %135 = vmatmul.f32.gmra.mxu0 %v53
    %v136 = vpop.f32.mrf.mxu0
    %v137 = vadd.f32 0.0, %v136
    %138 = vmatmul.f32.gmra.mxu0 %v54
    %v139 = vpop.f32.mrf.mxu0
    %v140 = vadd.f32 0.0, %v139
    %141 = vmatmul.f32.gmra.mxu0 %v55
    %v142 = vpop.f32.mrf.mxu0
    %v143 = vadd.f32 0.0, %v142
    %144 = vmatmul.f32.gmra.mxu0 %v56
    %v145 = vpop.f32.mrf.mxu0
    %v146 = vadd.f32 0.0, %v145
    %147 = vmatmul.f32.gmra.mxu0 %v57
    %v148 = vpop.f32.mrf.mxu0
    %v149 = vadd.f32 0.0, %v148
    %150 = vmatmul.f32.gmra.mxu0 %v58
    %v151 = vpop.f32.mrf.mxu0
    %v152 = vadd.f32 0.0, %v151
    %153 = vmatmul.f32.gmra.mxu0 %v59
    %v154 = vpop.f32.mrf.mxu0
    %v155 = vadd.f32 0.0, %v154
    %156 = vmatmul.f32.gmra.mxu0 %v60
    %v157 = vpop.f32.mrf.mxu0
    %v158 = vadd.f32 0.0, %v157
    %159 = vmatmul.f32.gmra.mxu0 %v61
    %v160 = vpop.f32.mrf.mxu0
    %v161 = vadd.f32 0.0, %v160
    %162 = vmatmul.f32.gmra.mxu0 %v62
    %v163 = vpop.f32.mrf.mxu0
    %v164 = vadd.f32 0.0, %v163
    %165 = vmatmul.f32.gmra.mxu0 %v63
    %v166 = vpop.f32.mrf.mxu0
    %v167 = vadd.f32 0.0, %v166
    %168 = vmatmul.f32.gmra.mxu0 %v64
    %v169 = vpop.f32.mrf.mxu0
    %v170 = vadd.f32 0.0, %v169
    %171 = vmatmul.f32.gmra.mxu0 %v65
    %v172 = vpop.f32.mrf.mxu0
    %v173 = vadd.f32 0.0, %v172
    %174 = vmatmul.f32.gmra.mxu0 %v66
    %v175 = vpop.f32.mrf.mxu0
    %v176 = vadd.f32 0.0, %v175
    %177 = vmatmul.f32.gmra.mxu0 %v67
    %v178 = vpop.f32.mrf.mxu0
    %v179 = vadd.f32 0.0, %v178
    %180 = vmatmul.f32.gmra.mxu0 %v68
    %v181 = vpop.f32.mrf.mxu0
    %v182 = vadd.f32 0.0, %v181
    %183 = vmatmul.f32.gmra.mxu0 %v69
    %v184 = vpop.f32.mrf.mxu0
    %v185 = vadd.f32 0.0, %v184
    %186 = vmatmul.f32.gmra.mxu0 %v70
    %v187 = vpop.f32.mrf.mxu0
    %v188 = vadd.f32 0.0, %v187
    %189 = vmatmul.f32.gmra.mxu0 %v71
    %v190 = vpop.f32.mrf.mxu0
    %v191 = vadd.f32 0.0, %v190
    %192 = vmatmul.f32.gmra.mxu0 %v72
    %v193 = vpop.f32.mrf.mxu0
    %v194 = vadd.f32 0.0, %v193
    %195 = vmatmul.f32.gmra.mxu0 %v73
    %v196 = vpop.f32.mrf.mxu0
    %v197 = vadd.f32 0.0, %v196
    %198 = vmatmul.f32.gmra.mxu0 %v74
    %v199 = vpop.f32.mrf.mxu0
    %v200 = vadd.f32 0.0, %v199
    %201 = vmatmul.f32.gmra.mxu0 %v75
    %v202 = vpop.f32.mrf.mxu0
    %v203 = vadd.f32 0.0, %v202
    %204 = vdwg.mxu0
    %v205 = vpack.c.bf16 %v110, %v110
    %v206 = vpack.c.bf16 %v113, %v113
    %v207 = vpack.c.bf16 %v116, %v116
    %v208 = vpack.c.bf16 %v119, %v119
    %v209 = vpack.c.bf16 %v122, %v122
    %v210 = vpack.c.bf16 %v125, %v125
    %v211 = vpack.c.bf16 %v128, %v128
    %v212 = vpack.c.bf16 %v131, %v131
    %v213 = vpack.c.bf16 %v134, %v134
    %v214 = vpack.c.bf16 %v137, %v137
    %v215 = vpack.c.bf16 %v140, %v140
    %v216 = vpack.c.bf16 %v143, %v143
    %v217 = vpack.c.bf16 %v146, %v146
    %v218 = vpack.c.bf16 %v149, %v149
    %v219 = vpack.c.bf16 %v152, %v152
    %v220 = vpack.c.bf16 %v155, %v155
    %v221 = vpack.c.bf16 %v158, %v158
    %v222 = vpack.c.bf16 %v161, %v161
    %v223 = vpack.c.bf16 %v164, %v164
    %v224 = vpack.c.bf16 %v167, %v167
    %v225 = vpack.c.bf16 %v170, %v170
    %v226 = vpack.c.bf16 %v173, %v173
    %v227 = vpack.c.bf16 %v176, %v176
    %v228 = vpack.c.bf16 %v179, %v179
    %v229 = vpack.c.bf16 %v182, %v182
    %v230 = vpack.c.bf16 %v185, %v185
    %v231 = vpack.c.bf16 %v188, %v188
    %v232 = vpack.c.bf16 %v191, %v191
    %v233 = vpack.c.bf16 %v194, %v194
    %v234 = vpack.c.bf16 %v197, %v197
    %v235 = vpack.c.bf16 %v200, %v200
    %v236 = vpack.c.bf16 %v203, %v203
    %237 = vst [vmem:[#allocation7] sm:$0xf] %v205
    %238 = vst [vmem:[#allocation7 + $0x4] sm:$0xf] %v206
    %239 = vst [vmem:[#allocation7 + $0x8] sm:$0xf] %v207
    %240 = vst [vmem:[#allocation7 + $0xc] sm:$0xf] %v208
    %241 = vst [vmem:[#allocation7 + $0x10] sm:$0xf] %v209
    %242 = vst [vmem:[#allocation7 + $0x14] sm:$0xf] %v210
    %243 = vst [vmem:[#allocation7 + $0x18] sm:$0xf] %v211
    %244 = vst [vmem:[#allocation7 + $0x1c] sm:$0xf] %v212
    %245 = vst [vmem:[#allocation7 + $0x20] sm:$0xf] %v213
    %246 = vst [vmem:[#allocation7 + $0x24] sm:$0xf] %v214
    %247 = vst [vmem:[#allocation7 + $0x28] sm:$0xf] %v215
    %248 = vst [vmem:[#allocation7 + $0x2c] sm:$0xf] %v216
    %249 = vst [vmem:[#allocation7 + $0x30] sm:$0xf] %v217
    %250 = vst [vmem:[#allocation7 + $0x34] sm:$0xf] %v218
    %251 = vst [vmem:[#allocation7 + $0x38] sm:$0xf] %v219
    %252 = vst [vmem:[#allocation7 + $0x3c] sm:$0xf] %v220
    %253 = vst [vmem:[#allocation7 + $0x40] sm:$0xf] %v221
    %254 = vst [vmem:[#allocation7 + $0x44] sm:$0xf] %v222
    %255 = vst [vmem:[#allocation7 + $0x48] sm:$0xf] %v223
    %256 = vst [vmem:[#allocation7 + $0x4c] sm:$0xf] %v224
    %257 = vst [vmem:[#allocation7 + $0x50] sm:$0xf] %v225
    %258 = vst [vmem:[#allocation7 + $0x54] sm:$0xf] %v226
    %259 = vst [vmem:[#allocation7 + $0x58] sm:$0xf] %v227
    %260 = vst [vmem:[#allocation7 + $0x5c] sm:$0xf] %v228
    %261 = vst [vmem:[#allocation7 + $0x60] sm:$0xf] %v229
    %262 = vst [vmem:[#allocation7 + $0x64] sm:$0xf] %v230
    %263 = vst [vmem:[#allocation7 + $0x68] sm:$0xf] %v231
    %264 = vst [vmem:[#allocation7 + $0x6c] sm:$0xf] %v232
    %265 = vst [vmem:[#allocation7 + $0x70] sm:$0xf] %v233
    %266 = vst [vmem:[#allocation7 + $0x74] sm:$0xf] %v234
    %267 = vst [vmem:[#allocation7 + $0x78] sm:$0xf] %v235
    %268 = vst [vmem:[#allocation7 + $0x7c] sm:$0xf] %v236
    // Predicated region
    $region18: #{tpu_custom_call.1} parent=1 // pred_check
      _
    $region19: #{tpu_custom_call.1} parent=1 // pred_check_branch
      %270 = sbr.rel (0) target = $region21
    $region20: #{tpu_custom_call.1} parent=1 // pred_region
      %272 = vsyncadd [#allocation4], 0
      %s273 = sshll.u32 [#allocation7], 4
      %s274 = int_to_ptr.vmem [resolvable:$true] %s273
      %s275 = sshll.u32 %s2, 4
      %s276 = int_to_ptr.hbm [resolvable:$true] %s275
      %281 = dma.vmem_to_hbm [thread:$0]  %s274, 2048, %s276, [#allocation4], 64, 64, 4
    $region21: #{tpu_custom_call.1} parent=1 // pred_fallthru
      _
    // Predicated region
    $region22: #{tpu_custom_call.1} parent=1 // pred_check
      _
    $region23: #{tpu_custom_call.1} parent=1 // pred_check_branch
      %283 = sbr.rel (0) target = $region25
    $region24: #{tpu_custom_call.1} parent=1 // pred_region
      %285 = dma.done [#allocation4], 2048
    $region25: #{tpu_custom_call.1} parent=1 // pred_fallthru
      _
    %286 = vsyncpa [#allocation3], 1
    %287 = vsyncpa [#allocation6], 1
    %288 = vsyncpa [#allocation4], 1

</llo_original>
